<compile_context>
chip_gen: v7x
topology: tpu7x:2x2x1
jax: 0.10.0
libtpu: 0.0.40
codegen_flags: <defaults>
</compile_context>

<pallas_src>
import jax
import jax.numpy as jnp
from jax.experimental import pallas as pl
from jax.experimental.pallas import tpu as pltpu

BN_EPS = 1e-5
_VMEM_LIMIT = 32 * 1024 * 1024  # explicit scoped-VMEM limit (safe on v5e/v6e/v7x)


def _choose_spatial_tile(C, hw_pad, itemsize,
                         budget_bytes=8 * 1024 * 1024, max_tile=2048):
    """Largest 128*2^k tile dividing hw_pad whose double-buffered in+out
    footprint (~4*C*T*itemsize) stays under a small VMEM budget."""
    tile = 128
    t = 128
    while t <= min(hw_pad, max_tile):
        if hw_pad % t == 0 and 4 * C * t * itemsize <= budget_bytes:
            tile = t
        t *= 2
    return tile


def pool_kernel(x_ref, sum_ref):
    """Phase 1: accumulate spatial sums in f32.

    x_ref:   (1, C, T)  input tile (native dtype)
    sum_ref: (1, C, 1)  f32 accumulator, resident across the spatial grid axis
    """
    @pl.when(pl.program_id(1) == 0)
    def _():
        sum_ref[...] = jnp.zeros_like(sum_ref)

    # Accumulate in float32 regardless of input dtype (bf16-safe mean).
    sum_ref[...] += jnp.sum(x_ref[...], axis=-1, keepdims=True,
                            dtype=jnp.float32)


def scale_kernel(gate_ref, x_ref, o_ref):
    """Phase 2: broadcast-multiply in the input dtype (no f32 upcast of slab).

    gate_ref: (1, C, 1)  f32 gate for this batch element
    x_ref:    (1, C, T)  input tile
    o_ref:    (1, C, T)  output tile
    """
    o_ref[...] = x_ref[...] * gate_ref[...].astype(x_ref.dtype)


def arm_mixer(x, conv_w, conv_b, bn_gamma, bn_beta, bn_mean, bn_var):
    """x: [B, C, H, W] (NCHW, like PyTorch).  Returns [B, C, H, W]."""
    B, C, H, W = x.shape
    HW = H * W
    hw_pad = ((HW + 127) // 128) * 128          # lane-dense spatial axis
    itemsize = jnp.dtype(x.dtype).itemsize

    x_flat = x.reshape(B, C, HW)
    if hw_pad != HW:
        x_flat = jnp.pad(x_flat, ((0, 0), (0, 0), (0, hw_pad - HW)))

    tile = _choose_spatial_tile(C, hw_pad, itemsize)
    n_tiles = hw_pad // tile

    # ---- Phase 1: pooled sums (memory-bound, spatially tiled) -------------
    pooled_sum = pl.pallas_call(
        pool_kernel,
        out_shape=jax.ShapeDtypeStruct((B, C, 1), jnp.float32),
        grid=(B, n_tiles),
        in_specs=[pl.BlockSpec((1, C, tile), lambda b, j: (b, 0, j))],
        out_specs=pl.BlockSpec((1, C, 1), lambda b, j: (b, 0, 0)),
        compiler_params=pltpu.CompilerParams(
            dimension_semantics=("parallel", "arbitrary"),
            vmem_limit_bytes=_VMEM_LIMIT),
        cost_estimate=pl.CostEstimate(
            flops=B * C * hw_pad,
            transcendentals=0,
            bytes_accessed=B * C * hw_pad * itemsize + B * C * 4),
    )(x_flat)

    # ---- Gate: fold BN + 1/HW into the conv weight/bias; tiny XLA matmul --
    f32 = jnp.float32
    inv_std = jax.lax.rsqrt(bn_var.astype(f32) + BN_EPS)
    scale = bn_gamma.astype(f32) * inv_std                       # (C_out,)
    w2d = conv_w.reshape(C, C).astype(f32)                       # (C_out, C_in)
    w_folded = (w2d * scale[:, None]).T * (1.0 / HW)             # (C_in, C_out)
    b_folded = (conv_b.astype(f32) - bn_mean.astype(f32)) * scale \
        + bn_beta.astype(f32)                                    # (C_out,)
    pooled = pooled_sum.reshape(B, C)                            # f32 sums
    gate = jax.nn.sigmoid(pooled @ w_folded + b_folded)          # (B, C) f32
    gate = gate.reshape(B, C, 1)

    # ---- Phase 2: spatially tiled broadcast multiply ----------------------
    out_flat = pl.pallas_call(
        scale_kernel,
        out_shape=jax.ShapeDtypeStruct((B, C, hw_pad), x.dtype),
        grid=(B, n_tiles),
        in_specs=[
            pl.BlockSpec((1, C, 1), lambda b, j: (b, 0, 0)),      # gate
            pl.BlockSpec((1, C, tile), lambda b, j: (b, 0, j)),   # x tile
        ],
        out_specs=pl.BlockSpec((1, C, tile), lambda b, j: (b, 0, j)),
        compiler_params=pltpu.CompilerParams(
            dimension_semantics=("parallel", "parallel"),
            vmem_limit_bytes=_VMEM_LIMIT),
        cost_estimate=pl.CostEstimate(
            flops=B * C * hw_pad,
            transcendentals=0,
            bytes_accessed=2 * B * C * hw_pad * itemsize + B * C * 4),
    )(gate, x_flat)

    if hw_pad != HW:
        out_flat = out_flat[:, :, :HW]
    return out_flat.reshape(B, C, H, W)


def arm_mixer_ref(x, conv_w, conv_b, bn_gamma, bn_beta, bn_mean, bn_var):
    """Pure-JAX reference of the same forward pass."""
    xf = x.astype(jnp.float32)
    pooled = jnp.mean(xf, axis=(2, 3))                          # (B, C)
    y = pooled @ conv_w.reshape(conv_w.shape[0], -1).T + conv_b
    y = (y - bn_mean) / jnp.sqrt(bn_var + BN_EPS) * bn_gamma + bn_beta
    gate = jax.nn.sigmoid(y)[:, :, None, None]
    return (xf * gate).astype(x.dtype)


def _make_params(key, C):
    k_w, k_b = jax.random.split(key)
    fan_in = C  # conv1x1: in_channels * 1 * 1
    bound = 1.0 / (fan_in ** 0.5)
    conv_w = jax.random.uniform(k_w, (C, C, 1, 1), jnp.float32, -bound, bound)
    conv_b = jax.random.uniform(k_b, (C,), jnp.float32, -bound, bound)
    bn_gamma = jnp.ones((C,), jnp.float32)
    bn_beta = jnp.zeros((C,), jnp.float32)
    bn_mean = jnp.zeros((C,), jnp.float32)      # PyTorch BN defaults
    bn_var = jnp.ones((C,), jnp.float32)
    return conv_w, conv_b, bn_gamma, bn_beta, bn_mean, bn_var


if __name__ == "__main__":
    key = jax.random.PRNGKey(0)
    k_main, k_x1, k_x2, k_p1, k_p2 = jax.random.split(key, 5)

    # Primary check: 128-aligned spatial size.
    B, C, H, W = 2, 4, 16, 16
    x = jax.random.normal(k_x1, (B, C, H, W), dtype=jnp.float32)
    params = _make_params(k_p1, C)
    out = jax.block_until_ready(arm_mixer(x, *params))
    ref = arm_mixer_ref(x, *params)
    assert out.shape == (B, C, H, W)
    assert jnp.allclose(out, ref, atol=1e-5, rtol=1e-5)

    # Secondary check: non-128-aligned spatial size (exercises padding path).
    B2, C2, H2, W2 = 1, 8, 10, 10
    x2 = jax.random.normal(k_x2, (B2, C2, H2, W2), dtype=jnp.float32)
    params2 = _make_params(k_p2, C2)
    out2 = jax.block_until_ready(arm_mixer(x2, *params2))
    ref2 = arm_mixer_ref(x2, *params2)
    assert out2.shape == (B2, C2, H2, W2)
    assert jnp.allclose(out2, ref2, atol=1e-5, rtol=1e-5)

    print("KERNEL_OK")
</pallas_src>

<mosaic_0001>
module attributes {stable_mosaic.version = 11 : i64} {
  func.func @pool_kernel(%arg0: i32, %arg1: i32, %arg2: memref<1x4x256xf32, #tpu.memory_space<vmem>>, %arg3: memref<1x4x1xf32, #tpu.memory_space<vmem>>) attributes {dimension_semantics = [#tpu.dimension_semantics<parallel>, #tpu.dimension_semantics<arbitrary>], iteration_bounds = array<i64: 2, 1>, scalar_prefetch = 0 : i64, scratch_operands = 0 : i64, tpu.core_type = #tpu.core_type<tc>, window_params = [{transform_indices = @transform_0, window_bounds = array<i64: 1, 4, 256>}, {transform_indices = @transform_1, window_bounds = array<i64: 1, 4, 1>}]} {
    %c0_i32 = arith.constant 0 : i32
    %0 = arith.cmpi eq, %arg1, %c0_i32 : i32
    %1 = arith.extui %0 : i1 to i32
    %c0_i32_0 = arith.constant 0 : i32
    %2 = arith.cmpi ne, %1, %c0_i32_0 : i32
    scf.if %2 {
      %cst_9 = arith.constant 0.000000e+00 : f32
      %9 = vector.broadcast %cst_9 : f32 to vector<1x4x1xf32>
      %c0_10 = arith.constant 0 : index
      %c0_11 = arith.constant 0 : index
      %c0_12 = arith.constant 0 : index
      %10 = vector.load %arg3[%c0_10, %c0_11, %c0_12] : memref<1x4x1xf32, #tpu.memory_space<vmem>>, vector<1x4x1xf32>
      tpu.vector_store %arg3[%c0_10, %c0_11, %c0_12], %9 {strides = array<i32>} : memref<1x4x1xf32, #tpu.memory_space<vmem>>, vector<1x4x1xf32>,
    } else {
    }
    %c0 = arith.constant 0 : index
    %c0_1 = arith.constant 0 : index
    %c0_2 = arith.constant 0 : index
    %3 = vector.load %arg3[%c0, %c0_1, %c0_2] : memref<1x4x1xf32, #tpu.memory_space<vmem>>, vector<1x4x1xf32>
    %c0_3 = arith.constant 0 : index
    %c0_4 = arith.constant 0 : index
    %c0_5 = arith.constant 0 : index
    %4 = vector.load %arg2[%c0_3, %c0_4, %c0_5] : memref<1x4x256xf32, #tpu.memory_space<vmem>>, vector<1x4x256xf32>
    %cst = arith.constant dense<0.000000e+00> : vector<1x4xf32>
    %5 = vector.multi_reduction <add>, %4, %cst [2] : vector<1x4x256xf32> to vector<1x4xf32>
    %6 = vector.shape_cast %5 : vector<1x4xf32> to vector<1x4x1xf32>
    %7 = arith.addf %3, %6 : vector<1x4x1xf32>
    %c0_6 = arith.constant 0 : index
    %c0_7 = arith.constant 0 : index
    %c0_8 = arith.constant 0 : index
    %8 = vector.load %arg3[%c0_6, %c0_7, %c0_8] : memref<1x4x1xf32, #tpu.memory_space<vmem>>, vector<1x4x1xf32>
    tpu.vector_store %arg3[%c0_6, %c0_7, %c0_8], %7 {strides = array<i32>} : memref<1x4x1xf32, #tpu.memory_space<vmem>>, vector<1x4x1xf32>,
    return
  }
  func.func @transform_0(%arg0: i32, %arg1: i32) -> (i32, i32, i32) {
    %c0_i32 = arith.constant 0 : i32
    %c0_i32_0 = arith.constant 0 : i32
    return %arg0, %c0_i32, %arg1 : i32, i32, i32
  }
  func.func @transform_1(%arg0: i32, %arg1: i32) -> (i32, i32, i32) {
    %c0_i32 = arith.constant 0 : i32
    %c0_i32_0 = arith.constant 0 : i32
    %c0_i32_1 = arith.constant 0 : i32
    return %arg0, %c0_i32, %c0_i32_0 : i32, i32, i32
  }
}

</mosaic_0001>

<llo_original>
// kernel: tpu_custom_call.1
$region0: #{tpu_custom_call.1}
  #allocation0 [shape = 'u32[]', space=smem, size = 0x4, offset = 0x4, fixed_abs, tag = 'smem constant byte address 0x4 - core index']
  #allocation1 [shape = 'u32[144,128]{1,0:T(1,128)}', space=vmem, size = 0x12000, scoped, tag = 'internal scratch']
  %s0 = inlined_call_operand.hbm [shape: f32[2,4,256], index: 0, kind: input, shape index: {}]
  %s1 = inlined_call_operand.vmem [shape: f32[2,4,1], index: 1, kind: output, shape index: {}]
  %s2 = sld [smem:[#allocation0]]
  $region45: #{tpu_custom_call.1} parent=0
    _
  %s4 = ssub.s32 1, %s2
  %s5 = scalar_select 0, %s4, %s2
  $region1: #{tpu_custom_call.1} parent=0
    #allocation2 [shape = 'u8[8192]{0}', space=vmem, size = 0x2000, scoped, tag = 'input window, operand 0']
    #allocation3 [shape = 's32[2]{0}', space=sflag, size = 0x8, scoped, tag = 'scoped memory for tpu_custom_call.1']
    %6 = vsyncpa [#allocation3], 0
    %s7 = scalar_lea.sflag [#allocation3], 1
    %8 = vsyncpa %s7, 0
    loop: start=0, step=1, limit=4
    $region2: #{tpu_custom_call.1} parent=1 // loop_pre_header
      _
    $region3: #{tpu_custom_call.1} parent=1 // loop_header
      %s10 = sphi 0, %s14
      %p11 = scmp.ge.s32.totalorder %s10, 4
      %s17 = sphi 0, %s29
      %s18 = sphi 0, %s25
      %s19 = sphi 0, %s17
      %s20 = sphi 0, %s18
      %s21 = sphi 0, %s19
      %s22 = sphi 0, %s20
      %s34 = sphi 0, %s36
      %s37 = sphi 0, %s34
      %s38 = sphi 0, %s37
      %s54 = sphi 0, %s38
      %s60 = sphi 0, %s62
      %s63 = sphi 0, %s60
      %s64 = sphi 0, %s63
      %s80 = sphi 0, %s64
    $region4: #{tpu_custom_call.1} parent=1 // loop_header_branch
      %13 = sbr.rel (%p11) target = $region8
    $region5: #{tpu_custom_call.1} parent=1 // loop_body
      %s15 = ssub.s32 %s10, 1
      %s16 = ssub.s32 %s10, 2
      %s23 = sadd.s32 1, %s18
      %p24 = scmp.ge.s32.totalorder %s23, 1
      %s25 = scalar_select %p24, 0, %s23
      %s26 = sadd.s32 1, %s17
      %s27 = scalar_select %p24, %s26, %s17
      %p28 = scmp.ge.s32.totalorder %s27, 2
      %s29 = scalar_select %p28, 0, %s27
      %s30 = ssub.s32 %s17, %s29
      %s31 = ssub.s32 %s18, %s25
      %s32 = sor.u32 %s30, %s31
      %p33 = scmp.eq.s32.totalorder %s32, 0
      %s35 = sadd.s32 %s34, 1
      %s36 = scalar_select %p33, %s34, %s35
      %p39 = pneg %p33
      %p40 = scmp.eq.s32.totalorder %s10, 1
      %p41 = por %p39, %p40
      %p42 = scmp.ne.s32.totalorder %s34, %s37
      %p43 = scmp.eq.s32.totalorder %s10, 0
      %p44 = por %p42, %p43
      %p45 = scmp.ne.s32.totalorder %s34, %s37
      %p46 = scmp.eq.s32.totalorder %s15, 1
      %p47 = por %p45, %p46
      %p48 = scmp.ne.s32.totalorder %s37, %s38
      %p49 = scmp.eq.s32.totalorder %s15, 0
      %p50 = por %p48, %p49
      %p51 = scmp.ne.s32.totalorder %s37, %s38
      %p52 = scmp.eq.s32.totalorder %s16, 1
      %p53 = por %p51, %p52
      %p55 = scmp.ne.s32.totalorder %s38, %s54
      %p56 = scmp.eq.s32.totalorder %s16, 0
      %p57 = por %p55, %p56
      %s58 = ssub.s32 %s17, %s29
      %p59 = scmp.eq.s32.totalorder %s58, 0
      %s61 = sadd.s32 %s60, 1
      %s62 = scalar_select %p59, %s60, %s61
      %p65 = pneg %p59
      %p66 = scmp.eq.s32.totalorder %s10, 1
      %p67 = por %p65, %p66
      %p68 = scmp.ne.s32.totalorder %s60, %s63
      %p69 = scmp.eq.s32.totalorder %s10, 0
      %p70 = por %p68, %p69
      %p71 = scmp.ne.s32.totalorder %s60, %s63
      %p72 = scmp.eq.s32.totalorder %s15, 1
      %p73 = por %p71, %p72
      %p74 = scmp.ne.s32.totalorder %s63, %s64
      %p75 = scmp.eq.s32.totalorder %s15, 0
      %p76 = por %p74, %p75
      %p77 = scmp.ne.s32.totalorder %s63, %s64
      %p78 = scmp.eq.s32.totalorder %s16, 1
      %p79 = por %p77, %p78
      %p81 = scmp.ne.s32.totalorder %s64, %s80
      %p82 = scmp.eq.s32.totalorder %s16, 0
      %p83 = por %p81, %p82
      %p84 = scmp.le.s32.totalorder 1, %s10
      %p85 = scmp.lt.s32.totalorder %s10, 3
      %p86 = pnand %p84, %p85
      %p87 = pneg %p86
      // Predicated region
      $region9: #{tpu_custom_call.1} parent=5 // pred_check
        _
      $region10: #{tpu_custom_call.1} parent=5 // pred_check_branch
        %89 = sbr.rel (%p86) target = $region12
      $region11: #{tpu_custom_call.1} parent=5 // pred_region
        %s90 = ssub.s32 %s10, 1
      $region12: #{tpu_custom_call.1} parent=5 // pred_fallthru
        _
      %p91 = scmp.lt.s32.totalorder %s10, 2
      // Predicated region
      $region13: #{tpu_custom_call.1} parent=5 // pred_check
        %p92 = pneg %p91
      $region14: #{tpu_custom_call.1} parent=5 // pred_check_branch
        %94 = sbr.rel (%p92) target = $region16
      $region15: #{tpu_custom_call.1} parent=5 // pred_region
        // Predicated region
        $region17: #{tpu_custom_call.1} parent=15 // pred_check
          %p95 = pneg %p44
        $region18: #{tpu_custom_call.1} parent=15 // pred_check_branch
          %97 = sbr.rel (%p95) target = $region20
        $region19: #{tpu_custom_call.1} parent=15 // pred_region
          %s98 = sand.u32 %s34, 1
          %s99 = scalar_lea.sflag [#allocation3], %s98
          %s100 = sand.u32 %s34, 1
          %s101 = smul.addr %s100, 8
          %s102 = scalar_lea.vmem [#allocation2], %s101
          %s103 = smul.u32 2, %s18
          %s105 = ssub.s32 128, 128
          %106 = vsyncadd %s99, %s105
          %s107 = smul.addr %s17, 2
          %s108 = sadd.s32 %s103, %s107
          %s109 = smul.addr %s108, 64
          %s110 = scalar_lea.hbm %s0, %s109
          %s112 = sshll.u32 %s102, 4
          %s113 = int_to_ptr.vmem [resolvable:$true] %s112
          %115 = dma.hbm_to_vmem [thread:$0]  %s110, 128, %s113, %s99
        $region20: #{tpu_custom_call.1} parent=15 // pred_fallthru
          _
      $region16: #{tpu_custom_call.1} parent=5 // pred_fallthru
        _
      %p116 = scmp.le.s32.totalorder 1, %s10
      %p117 = scmp.lt.s32.totalorder %s10, 3
      %p118 = pnand %p116, %p117
      %p119 = pneg %p118
      // Predicated region
      $region21: #{tpu_custom_call.1} parent=5 // pred_check
        _
      $region22: #{tpu_custom_call.1} parent=5 // pred_check_branch
        %121 = sbr.rel (%p118) target = $region24
      $region23: #{tpu_custom_call.1} parent=5 // pred_region
        %s122 = ssub.s32 %s10, 1
        %s123 = sand.u32 %s37, 1
        %s124 = scalar_lea.sflag [#allocation3], %s123
        %s125 = sand.u32 %s37, 1
        %s126 = smul.addr %s125, 8
        %s127 = scalar_lea.vmem [#allocation2], %s126
        // Predicated region
        $region25: #{tpu_custom_call.1} parent=23 // pred_check
          %p128 = pneg %p50
        $region26: #{tpu_custom_call.1} parent=23 // pred_check_branch
          %130 = sbr.rel (%p128) target = $region28
        $region27: #{tpu_custom_call.1} parent=23 // pred_region
          %131 = dma.done %s124, 128
        $region28: #{tpu_custom_call.1} parent=23 // pred_fallthru
          _
        %s132 = sand.u32 %s37, 1
        %s133 = scalar_lea.sflag [#allocation3], %s132
        %s134 = sand.u32 %s37, 1
        %s135 = smul.addr %s134, 8
        %s136 = scalar_lea.vmem [#allocation2], %s135
        %p137 = pneg %p50
        %p138 = pneg %p47
        %p139 = pneg %p76
        %p140 = pneg %p73
        %p141 = scmp.lt.s32.totalorder %s19, 1
        %s142 = scalar_select %p141, %s19, 1
        %s143 = smul.addr %s142, 4
        %s144 = scalar_lea.vmem %s1, %s143
        %s145 = smul.u32 2, %s20
        %p146 = scmp.lt.s32.totalorder %s19, 1
        %s147 = scalar_select %p146, %s19, 1
        %s148 = smul.addr %s147, 4
        %s149 = scalar_lea.vmem %s1, %s148
        %p150 = scmp.eq.s32.totalorder %s20, 0
        // Predicated region
        $region29: #{tpu_custom_call.1} parent=23 // pred_check
          %p151 = pneg %p150
        $region30: #{tpu_custom_call.1} parent=23 // pred_check_branch
          %153 = sbr.rel (%p151) target = $region32
        $region31: #{tpu_custom_call.1} parent=23 // pred_region
          %vm154 = vcmask 3072
          %155 = vst.msk [vmem:[%s149] sm:$0xf] %vm154, 0.0
        $region32: #{tpu_custom_call.1} parent=23 // pred_fallthru
          _
        %v156 = vld [vmem:[%s149] sm:$0xf]
        %v157 = vld [vmem:[%s127] sm:$0xff]
        %v159 = vcombine.high %v157, %v157
        %vm161 = vcmask 1043456
        %v162 = vsel %vm161, %v157, 0.0
        %v163 = vsel %vm161, %v159, 0.0
        %v164 = vadd.f32 %v162, %v163
        %165 = vadd.xlane.f32.xlu0 %v164
        %v166 = vpop.xlane.xlu0 %165
        %v167 = vadd.f32 %v156, %v166
        %vm168 = vcmask 3072
        %169 = vst.msk [vmem:[%s149] sm:$0xf] %vm168, %v167
        %p170 = scmp.lt.s32.totalorder %s19, 1
        %s171 = scalar_select %p170, %s19, 1
        %s172 = smul.addr %s171, 4
        %s173 = scalar_lea.vmem %s1, %s172
        // Predicated region
        $region33: #{tpu_custom_call.1} parent=23 // pred_check
          %p174 = pneg %p73
        $region34: #{tpu_custom_call.1} parent=23 // pred_check_branch
          %176 = sbr.rel (%p174) target = $region36
        $region35: #{tpu_custom_call.1} parent=23 // pred_region
          _
        $region36: #{tpu_custom_call.1} parent=23 // pred_fallthru
          _
      $region24: #{tpu_custom_call.1} parent=5 // pred_fallthru
        _
      %p177 = scmp.le.s32.totalorder 2, %s10
      // Predicated region
      $region37: #{tpu_custom_call.1} parent=5 // pred_check
        %p178 = pneg %p177
      $region38: #{tpu_custom_call.1} parent=5 // pred_check_branch
        %180 = sbr.rel (%p178) target = $region40
      $region39: #{tpu_custom_call.1} parent=5 // pred_region
        %s181 = ssub.s32 %s10, 2
        // Predicated region
        $region41: #{tpu_custom_call.1} parent=39 // pred_check
          %p182 = pneg %p79
        $region42: #{tpu_custom_call.1} parent=39 // pred_check_branch
          %184 = sbr.rel (%p182) target = $region44
        $region43: #{tpu_custom_call.1} parent=39 // pred_region
          %p185 = scmp.lt.s32.totalorder %s21, 1
          %s186 = scalar_select %p185, %s21, 1
          %s187 = smul.addr %s186, 4
          %s188 = scalar_lea.vmem %s1, %s187
        $region44: #{tpu_custom_call.1} parent=39 // pred_fallthru
          _
      $region40: #{tpu_custom_call.1} parent=5 // pred_fallthru
        _
    $region6: #{tpu_custom_call.1} parent=1 // loop_footer
      %s14 = sadd.s32 1, %s10
    $region7: #{tpu_custom_call.1} parent=1 // loop_footer_branch
      %9 = sbr.rel target = $region3
    $region8: #{tpu_custom_call.1} parent=1 // loop_exit
      _
    %189 = vsyncpa [#allocation3], 1
    %s190 = scalar_lea.sflag [#allocation3], 1
    %191 = vsyncpa %s190, 1

</llo_original>
